<compile_context>
chip_gen: v7x
topology: tpu7x:2x2x1
jax: 0.10.0
libtpu: 0.0.40
codegen_flags: <defaults>
</compile_context>

<pallas_src>
import functools

import jax
import jax.numpy as jnp
from jax.experimental import pallas as pl
from jax.experimental.pallas import tpu as pltpu

HIDDEN = 256


def _round_up(x, m):
    return ((x + m - 1) // m) * m


def critic_kernel(x_ref, w1_ref, b1_ref, w2_ref, b2_ref, wq_ref, bq_ref, out_ref):
    # fc1: (TB, Kp) @ (Kp, 256) -- bf16 operands, f32 accumulation on the MXU.
    h1 = jnp.dot(x_ref[...], w1_ref[...], preferred_element_type=jnp.float32)
    h1 = jnp.maximum(h1 + b1_ref[...], 0.0)                 # bias + ReLU in f32 (VPU)

    # fc2: (TB, 256) @ (256, 256) -- dominant FLOPs, bf16 operands, f32 accum.
    h2 = jnp.dot(h1.astype(w2_ref.dtype), w2_ref[...],
                 preferred_element_type=jnp.float32)
    h2 = jnp.maximum(h2 + b2_ref[...], 0.0)

    # Q head (256 -> 1): keep it OFF the MXU.  VPU multiply + XLU lane-reduce;
    # these slots are idle while fc1/fc2 own the MXU, so the head is ~free.
    q = jnp.sum(h2 * wq_ref[...], axis=-1, keepdims=True) + bq_ref[...]
    out_ref[...] = q.astype(out_ref.dtype)


@functools.partial(jax.jit, static_argnames=("block_b", "compute_dtype"))
def critic_forward(state, action, params, *, block_b=1024,
                   compute_dtype=jnp.bfloat16):
    """state: (B, Ds) f32, action: (B, Da) f32 -> (B, 1) f32."""
    w1, b1, w2, b2, wq, bq = params
    B = state.shape[0]
    K = state.shape[1] + action.shape[1]
    H = w2.shape[0]

    # Fold the concat into the wrapper; pad K so the fc1 contraction dim is
    # sublane-aligned for bf16 (zeros contribute exactly zero).
    Kp = _round_up(K, 32)
    x = jnp.concatenate([state, action], axis=1)
    if Kp != K:
        x = jnp.pad(x, ((0, 0), (0, Kp - K)))
        w1 = jnp.pad(w1, ((0, Kp - K), (0, 0)))

    # Batch tiling: TB multiple of 16 (bf16 sublane packing); pad B up to a
    # multiple of TB (padded rows are sliced off after the call).
    tb = min(block_b, _round_up(B, 16))
    Bp = _round_up(B, tb)
    if Bp != B:
        x = jnp.pad(x, ((0, Bp - B), (0, 0)))

    # bf16 MXU operands; biases / head weights stay f32 for VPU math.
    x = x.astype(compute_dtype)
    w1c = w1.astype(compute_dtype)
    w2c = w2.astype(compute_dtype)

    itemsize = jnp.dtype(compute_dtype).itemsize
    flops = 2 * Bp * (Kp * H + H * H + H)
    bytes_accessed = (x.size * itemsize + (w1c.size + w2c.size) * itemsize
                      + (b1.size + b2.size + wq.size + bq.size) * 4 + Bp * 4)

    out = pl.pallas_call(
        critic_kernel,
        out_shape=jax.ShapeDtypeStruct((Bp, 1), jnp.float32),
        grid=(Bp // tb,),
        in_specs=[
            pl.BlockSpec((tb, Kp), lambda i: (i, 0)),     # x: batch-tiled
            pl.BlockSpec((Kp, H), lambda i: (0, 0)),      # w1: resident
            pl.BlockSpec((1, H), lambda i: (0, 0)),       # b1: resident
            pl.BlockSpec((H, H), lambda i: (0, 0)),       # w2: resident
            pl.BlockSpec((1, H), lambda i: (0, 0)),       # b2: resident
            pl.BlockSpec((1, H), lambda i: (0, 0)),       # wq row: resident
            pl.BlockSpec((1, 1), lambda i: (0, 0)),       # bq: resident
        ],
        out_specs=pl.BlockSpec((tb, 1), lambda i: (i, 0)),
        compiler_params=pltpu.CompilerParams(
            dimension_semantics=("parallel",)),
        cost_estimate=pl.CostEstimate(flops=flops, transcendentals=0,
                                      bytes_accessed=bytes_accessed),
    )(x, w1c, b1, w2c, b2, wq, bq)
    return out[:B]


def init_params(key, state_dim, action_dim):
    """Deterministic init mimicking PyTorch nn.Linear: U(-1/sqrt(fan_in), 1/sqrt(fan_in)).

    Weights stored as (in_features, out_features); wq stored as a (1, 256) row.
    """
    def linear(k, fan_in, fan_out):
        kw, kb = jax.random.split(k)
        bound = 1.0 / jnp.sqrt(float(fan_in))
        w = jax.random.uniform(kw, (fan_in, fan_out), jnp.float32, -bound, bound)
        b = jax.random.uniform(kb, (1, fan_out), jnp.float32, -bound, bound)
        return w, b

    k1, k2, k3 = jax.random.split(key, 3)
    w1, b1 = linear(k1, state_dim + action_dim, HIDDEN)
    w2, b2 = linear(k2, HIDDEN, HIDDEN)
    wq, bq = linear(k3, HIDDEN, 1)
    wq = wq.T                                   # (1, HIDDEN) row for the VPU head
    return (w1, b1, w2, b2, wq, bq)


def critic_reference(state, action, params, compute_dtype=jnp.bfloat16):
    """Pure-JAX reference matching the PyTorch forward (same bf16/f32 policy)."""
    w1, b1, w2, b2, wq, bq = params
    x = jnp.concatenate([state, action], axis=1).astype(compute_dtype)
    h1 = jax.nn.relu(jnp.dot(x, w1.astype(compute_dtype),
                             preferred_element_type=jnp.float32) + b1)
    h2 = jax.nn.relu(jnp.dot(h1.astype(compute_dtype), w2.astype(compute_dtype),
                             preferred_element_type=jnp.float32) + b2)
    return jnp.sum(h2 * wq, axis=-1, keepdims=True) + bq


if __name__ == "__main__":
    STATE_DIM, ACTION_DIM = 16, 8

    key = jax.random.PRNGKey(0)
    k_s, k_a, k_p = jax.random.split(key, 3)
    params = init_params(k_p, STATE_DIM, ACTION_DIM)

    # Small batch (single grid step, full-array tiles).
    B = 8
    state = jax.random.normal(k_s, (B, STATE_DIM), jnp.float32)
    action = jax.random.normal(k_a, (B, ACTION_DIM), jnp.float32)
    q = jax.block_until_ready(critic_forward(state, action, params))
    q_ref = critic_reference(state, action, params)
    assert q.shape == (B, 1), q.shape
    assert jnp.allclose(q, q_ref, atol=2e-3, rtol=2e-3), (q, q_ref)

    # Batch that exercises the grid (3 tiles of 16 rows) + batch padding path.
    B2 = 40
    state2 = jax.random.normal(k_s, (B2, STATE_DIM), jnp.float32)
    action2 = jax.random.normal(k_a, (B2, ACTION_DIM), jnp.float32)
    q2 = jax.block_until_ready(critic_forward(state2, action2, params, block_b=16))
    q2_ref = critic_reference(state2, action2, params)
    assert q2.shape == (B2, 1), q2.shape
    assert jnp.allclose(q2, q2_ref, atol=2e-3, rtol=2e-3), (q2, q2_ref)

    print("KERNEL_OK")
</pallas_src>

<mosaic_0001>
module attributes {stable_mosaic.version = 11 : i64} {
  func.func @critic_kernel(%arg0: i32, %arg1: memref<16x32xbf16, #tpu.memory_space<vmem>>, %arg2: memref<32x256xbf16, #tpu.memory_space<vmem>>, %arg3: memref<1x256xf32, #tpu.memory_space<vmem>>, %arg4: memref<256x256xbf16, #tpu.memory_space<vmem>>, %arg5: memref<1x256xf32, #tpu.memory_space<vmem>>, %arg6: memref<1x256xf32, #tpu.memory_space<vmem>>, %arg7: memref<1x1xf32, #tpu.memory_space<vmem>>, %arg8: memref<16x1xf32, #tpu.memory_space<vmem>>) attributes {dimension_semantics = [#tpu.dimension_semantics<parallel>], iteration_bounds = array<i64: 1>, scalar_prefetch = 0 : i64, scratch_operands = 0 : i64, tpu.core_type = #tpu.core_type<tc>, window_params = [{transform_indices = @transform_0, window_bounds = array<i64: 16, 32>}, {pipeline_mode = #tpu.pipeline_mode<synchronous>, transform_indices = @transform_1, window_bounds = array<i64: 32, 256>}, {pipeline_mode = #tpu.pipeline_mode<synchronous>, transform_indices = @transform_2, window_bounds = array<i64: 1, 256>}, {pipeline_mode = #tpu.pipeline_mode<synchronous>, transform_indices = @transform_3, window_bounds = array<i64: 256, 256>}, {pipeline_mode = #tpu.pipeline_mode<synchronous>, transform_indices = @transform_4, window_bounds = array<i64: 1, 256>}, {pipeline_mode = #tpu.pipeline_mode<synchronous>, transform_indices = @transform_5, window_bounds = array<i64: 1, 256>}, {pipeline_mode = #tpu.pipeline_mode<synchronous>, transform_indices = @transform_6, window_bounds = array<i64: 1, 1>}, {transform_indices = @transform_7, window_bounds = array<i64: 16, 1>}]} {
    %c0 = arith.constant 0 : index
    %c0_0 = arith.constant 0 : index
    %0 = vector.load %arg1[%c0, %c0_0] : memref<16x32xbf16, #tpu.memory_space<vmem>>, vector<16x32xbf16>
    %c0_1 = arith.constant 0 : index
    %c0_2 = arith.constant 0 : index
    %1 = vector.load %arg2[%c0_1, %c0_2] : memref<32x256xbf16, #tpu.memory_space<vmem>>, vector<32x256xbf16>
    %cst = arith.constant dense<0.000000e+00> : vector<16x256xf32>
    %2 = tpu.matmul %0, %1, %cst {dimension_numbers = #tpu.dot_dimension_numbers<[1], [0], [0], [1], [0, 0, 1, 1], [], []>} : vector<16x32xbf16>, vector<32x256xbf16>, vector<16x256xf32> -> vector<16x256xf32>
    %c0_3 = arith.constant 0 : index
    %c0_4 = arith.constant 0 : index
    %3 = vector.load %arg3[%c0_3, %c0_4] : memref<1x256xf32, #tpu.memory_space<vmem>>, vector<1x256xf32>
    %4 = vector.broadcast %3 : vector<1x256xf32> to vector<16x256xf32>
    %5 = arith.addf %2, %4 : vector<16x256xf32>
    %cst_5 = arith.constant 0.000000e+00 : f32
    %6 = vector.broadcast %cst_5 : f32 to vector<16x256xf32>
    %7 = arith.maximumf %5, %6 : vector<16x256xf32>
    %8 = arith.truncf %7 : vector<16x256xf32> to vector<16x256xbf16>
    %c0_6 = arith.constant 0 : index
    %c0_7 = arith.constant 0 : index
    %9 = vector.load %arg4[%c0_6, %c0_7] : memref<256x256xbf16, #tpu.memory_space<vmem>>, vector<256x256xbf16>
    %cst_8 = arith.constant dense<0.000000e+00> : vector<16x256xf32>
    %10 = tpu.matmul %8, %9, %cst_8 {dimension_numbers = #tpu.dot_dimension_numbers<[1], [0], [0], [1], [0, 0, 1, 1], [], []>} : vector<16x256xbf16>, vector<256x256xbf16>, vector<16x256xf32> -> vector<16x256xf32>
    %c0_9 = arith.constant 0 : index
    %c0_10 = arith.constant 0 : index
    %11 = vector.load %arg5[%c0_9, %c0_10] : memref<1x256xf32, #tpu.memory_space<vmem>>, vector<1x256xf32>
    %12 = vector.broadcast %11 : vector<1x256xf32> to vector<16x256xf32>
    %13 = arith.addf %10, %12 : vector<16x256xf32>
    %cst_11 = arith.constant 0.000000e+00 : f32
    %14 = vector.broadcast %cst_11 : f32 to vector<16x256xf32>
    %15 = arith.maximumf %13, %14 : vector<16x256xf32>
    %c0_12 = arith.constant 0 : index
    %c0_13 = arith.constant 0 : index
    %16 = vector.load %arg6[%c0_12, %c0_13] : memref<1x256xf32, #tpu.memory_space<vmem>>, vector<1x256xf32>
    %17 = vector.broadcast %16 : vector<1x256xf32> to vector<16x256xf32>
    %18 = arith.mulf %15, %17 : vector<16x256xf32>
    %cst_14 = arith.constant dense<0.000000e+00> : vector<16xf32>
    %19 = vector.multi_reduction <add>, %18, %cst_14 [1] : vector<16x256xf32> to vector<16xf32>
    %20 = vector.shape_cast %19 : vector<16xf32> to vector<16x1xf32>
    %c0_15 = arith.constant 0 : index
    %c0_16 = arith.constant 0 : index
    %21 = vector.load %arg7[%c0_15, %c0_16] : memref<1x1xf32, #tpu.memory_space<vmem>>, vector<1x1xf32>
    %22 = vector.broadcast %21 : vector<1x1xf32> to vector<16x1xf32>
    %23 = arith.addf %20, %22 : vector<16x1xf32>
    %c0_17 = arith.constant 0 : index
    %c0_18 = arith.constant 0 : index
    %24 = vector.load %arg8[%c0_17, %c0_18] : memref<16x1xf32, #tpu.memory_space<vmem>>, vector<16x1xf32>
    tpu.vector_store %arg8[%c0_17, %c0_18], %23 {strides = array<i32>} : memref<16x1xf32, #tpu.memory_space<vmem>>, vector<16x1xf32>,
    return
  }
  func.func @transform_0(%arg0: i32) -> (i32, i32) {
    %c0_i32 = arith.constant 0 : i32
    %c0_i32_0 = arith.constant 0 : i32
    return %arg0, %c0_i32 : i32, i32
  }
  func.func @transform_1(%arg0: i32) -> (i32, i32) {
    %c0_i32 = arith.constant 0 : i32
    %c0_i32_0 = arith.constant 0 : i32
    %c0_i32_1 = arith.constant 0 : i32
    return %c0_i32, %c0_i32_0 : i32, i32
  }
  func.func @transform_2(%arg0: i32) -> (i32, i32) {
    %c0_i32 = arith.constant 0 : i32
    %c0_i32_0 = arith.constant 0 : i32
    %c0_i32_1 = arith.constant 0 : i32
    return %c0_i32, %c0_i32_0 : i32, i32
  }
  func.func @transform_3(%arg0: i32) -> (i32, i32) {
    %c0_i32 = arith.constant 0 : i32
    %c0_i32_0 = arith.constant 0 : i32
    %c0_i32_1 = arith.constant 0 : i32
    return %c0_i32, %c0_i32_0 : i32, i32
  }
  func.func @transform_4(%arg0: i32) -> (i32, i32) {
    %c0_i32 = arith.constant 0 : i32
    %c0_i32_0 = arith.constant 0 : i32
    %c0_i32_1 = arith.constant 0 : i32
    return %c0_i32, %c0_i32_0 : i32, i32
  }
  func.func @transform_5(%arg0: i32) -> (i32, i32) {
    %c0_i32 = arith.constant 0 : i32
    %c0_i32_0 = arith.constant 0 : i32
    %c0_i32_1 = arith.constant 0 : i32
    return %c0_i32, %c0_i32_0 : i32, i32
  }
  func.func @transform_6(%arg0: i32) -> (i32, i32) {
    %c0_i32 = arith.constant 0 : i32
    %c0_i32_0 = arith.constant 0 : i32
    %c0_i32_1 = arith.constant 0 : i32
    return %c0_i32, %c0_i32_0 : i32, i32
  }
  func.func @transform_7(%arg0: i32) -> (i32, i32) {
    %c0_i32 = arith.constant 0 : i32
    %c0_i32_0 = arith.constant 0 : i32
    return %arg0, %c0_i32 : i32, i32
  }
}

</mosaic_0001>

<llo_original>
// kernel: critic_forward.1
$region0: #{critic_forward.1}
  #allocation0 [shape = 'u32[]', space=smem, size = 0x4, offset = 0x4, fixed_abs, tag = 'smem constant byte address 0x4 - core index']
  #allocation1 [shape = 'u32[144,128]{1,0:T(1,128)}', space=vmem, size = 0x12000, scoped, tag = 'internal scratch']
  #allocation2 [shape = 'f32[1,1]{1,0:T(1,128)S(1)}', space=vmem, size = 0x200, scoped, tag = 'scoped memory for critic_forward.1']
  %s0 = inlined_call_operand.vmem [shape: bf16[16,32], index: 0, kind: input, shape index: {}]
  %s1 = inlined_call_operand.vmem [shape: bf16[32,256], index: 1, kind: input, shape index: {}]
  %s2 = inlined_call_operand.vmem [shape: f32[1,256], index: 2, kind: input, shape index: {}]
  %s3 = inlined_call_operand.vmem [shape: bf16[256,256], index: 3, kind: input, shape index: {}]
  %s4 = inlined_call_operand.vmem [shape: f32[1,256], index: 4, kind: input, shape index: {}]
  %s5 = inlined_call_operand.vmem [shape: f32[1,256], index: 5, kind: input, shape index: {}]
  %s6 = inlined_call_operand.<no memory space> [shape: f32[1,1], index: 6, kind: input, shape index: {}]
  %s7 = inlined_call_operand.vmem [shape: f32[16,1], index: 7, kind: output, shape index: {}]
  %s8 = sld [smem:[#allocation0]]
  $region38: #{critic_forward.1} parent=0
    _
  %s10 = ssub.s32 1, %s8
  %s11 = scalar_select 0, %s10, %s8
  %v12 = vstv %s6
  %13 = vst [vmem:[#allocation2] sm:$0x1] %v12
  // Predicated region
  $region2: #{critic_forward.1} parent=0 // pred_check
    _
  $region3: #{critic_forward.1} parent=0 // pred_check_branch
    %15 = sbr.rel (0) target = $region5
  $region4: #{critic_forward.1} parent=0 // pred_region
    _
  $region5: #{critic_forward.1} parent=0 // pred_fallthru
    _
  // Predicated region
  $region6: #{critic_forward.1} parent=0 // pred_check
    _
  $region7: #{critic_forward.1} parent=0 // pred_check_branch
    %17 = sbr.rel (0) target = $region9
  $region8: #{critic_forward.1} parent=0 // pred_region
    _
  $region9: #{critic_forward.1} parent=0 // pred_fallthru
    _
  // Predicated region
  $region10: #{critic_forward.1} parent=0 // pred_check
    _
  $region11: #{critic_forward.1} parent=0 // pred_check_branch
    %19 = sbr.rel (0) target = $region13
  $region12: #{critic_forward.1} parent=0 // pred_region
    _
  $region13: #{critic_forward.1} parent=0 // pred_fallthru
    _
  // Predicated region
  $region14: #{critic_forward.1} parent=0 // pred_check
    _
  $region15: #{critic_forward.1} parent=0 // pred_check_branch
    %21 = sbr.rel (0) target = $region17
  $region16: #{critic_forward.1} parent=0 // pred_region
    _
  $region17: #{critic_forward.1} parent=0 // pred_fallthru
    _
  // Predicated region
  $region18: #{critic_forward.1} parent=0 // pred_check
    _
  $region19: #{critic_forward.1} parent=0 // pred_check_branch
    %23 = sbr.rel (0) target = $region21
  $region20: #{critic_forward.1} parent=0 // pred_region
    _
  $region21: #{critic_forward.1} parent=0 // pred_fallthru
    _
  // Predicated region
  $region22: #{critic_forward.1} parent=0 // pred_check
    _
  $region23: #{critic_forward.1} parent=0 // pred_check_branch
    %25 = sbr.rel (0) target = $region25
  $region24: #{critic_forward.1} parent=0 // pred_region
    _
  $region25: #{critic_forward.1} parent=0 // pred_fallthru
    _
  // Predicated region
  $region26: #{critic_forward.1} parent=0 // pred_check
    _
  $region27: #{critic_forward.1} parent=0 // pred_check_branch
    %27 = sbr.rel (0) target = $region29
  $region28: #{critic_forward.1} parent=0 // pred_region
    _
  $region29: #{critic_forward.1} parent=0 // pred_fallthru
    _
  %v29 = vld [vmem:[%s0] sm:$0xf]
  %v30 = vld [vmem:[%s0 + $0x4] sm:$0xf]
  %v31 = vld [vmem:[%s1] sm:$0xff]
  %v32 = vld [vmem:[%s1 + $0x8] sm:$0xff]
  %v33 = vld [vmem:[%s1 + $0x10] sm:$0xff]
  %v34 = vld [vmem:[%s1 + $0x18] sm:$0xff]
  %v35 = vld [vmem:[%s2] sm:$0x3]
  %v37 = vlaneseq
  %v38 = vshrl.u32 %v37, 7
  %v39 = vsub.s32 0, %v38
  %v40 = vrot.slane %v35, %v39
  %v41 = vlaneseq
  %v42 = vshrl.u32 %v41, 7
  %v43 = vsub.s32 1, %v42
  %v44 = vrot.slane %v35, %v43
  %v49 = vunpack.c.l.b16 %v29
  %v50 = vunpack.c.l.b16 %v30
  %v51 = vpack.c.b16 %v50, %v49
  %v56 = vunpack.c.l.b16 %v31
  %v57 = vunpack.c.h.b16 %v31
  %v58 = vunpack.c.l.b16 %v32
  %v59 = vunpack.c.h.b16 %v32
  %v60 = vunpack.c.l.b16 %v33
  %v61 = vunpack.c.h.b16 %v33
  %v62 = vunpack.c.l.b16 %v34
  %v63 = vunpack.c.h.b16 %v34
  %v64 = vpack.c.b16 %v58, %v56
  %v65 = vpack.c.b16 %v59, %v57
  %v66 = vpack.c.b16 %v62, %v60
  %v67 = vpack.c.b16 %v63, %v61
  %vm72 = vcmask 261120
  %v74 = vsel %vm72, %v51, 0
  %76 = vmatprep.subr.bf16.mxu0 %v65
  %77 = vmatpush1.bf16.msra.mxu0 %v64
  %78 = vmatprep.subr.bf16.mxu0 %v67
  %79 = vmatpush1.bf16.msra.mxu0 %v66
  %80 = vmatprep.subr.bf16.mxu0 0
  %81 = vmatpush1.bf16.msra.mxu0 0
  %82 = vmatprep.subr.bf16.mxu0 0
  %83 = vmatpush1.bf16.msra.mxu0 0
  %84 = vmatprep.subr.bf16.mxu0 0
  %85 = vmatpush1.bf16.msra.mxu0 0
  %86 = vmatprep.subr.bf16.mxu0 0
  %87 = vmatpush1.bf16.msra.mxu0 0
  %88 = vmatprep.subr.bf16.mxu0 0
  %89 = vmatpush1.bf16.msra.mxu0 0
  %90 = vmatprep.subr.bf16.mxu0 0
  %91 = vmatpush1.bf16.msra.mxu0 0
  %92 = vmatprep.subr.bf16.mxu0 0
  %93 = vmatpush1.bf16.msra.mxu0 0
  %94 = vmatprep.subr.bf16.mxu0 0
  %95 = vmatpush1.bf16.msra.mxu0 0
  %96 = vmatprep.subr.bf16.mxu0 0
  %97 = vmatpush1.bf16.msra.mxu0 0
  %98 = vmatprep.subr.bf16.mxu0 0
  %99 = vmatpush1.bf16.msra.mxu0 0
  %100 = vmatprep.subr.bf16.mxu0 0
  %101 = vmatpush1.bf16.msra.mxu0 0
  %102 = vmatprep.subr.bf16.mxu0 0
  %103 = vmatpush1.bf16.msra.mxu0 0
  %104 = vmatprep.subr.bf16.mxu0 0
  %105 = vmatpush1.bf16.msra.mxu0 0
  %106 = vmatprep.subr.bf16.mxu0 0
  %107 = vmatpush1.bf16.msra.mxu0 0
  %108 = vmatprep.mubr.bf16.mxu0 0
  %109 = vmatmul.mubr.bf16.gmra.mrb[0].mxu0 %v74
  %v110 = vpop.f32.mrb[0].mxu0
  %v111 = vadd.f32 %v40, %v110
  %v112 = vpop.f32.mrb[0].mxu0
  %v113 = vadd.f32 %v44, %v112
  %v114 = vpop.f32.mrb[0].mxu0
  %v115 = vadd.f32 %v40, %v114
  %v116 = vpop.f32.mrb[0].mxu0
  %v117 = vadd.f32 %v44, %v116
  %118 = vdwg.mxu0
  %v119 = vmax.f32 %v111, 0.0
  %v120 = vmax.f32 %v113, 0.0
  %v121 = vmax.f32 %v115, 0.0
  %v122 = vmax.f32 %v117, 0.0
  %v123 = vpack.c.bf16 %v121, %v119
  %v124 = vpack.c.bf16 %v122, %v120
  %v125 = vld [vmem:[%s3] sm:$0xff]
  %v126 = vld [vmem:[%s3 + $0x8] sm:$0xff]
  %v127 = vld [vmem:[%s3 + $0x10] sm:$0xff]
  %v128 = vld [vmem:[%s3 + $0x18] sm:$0xff]
  %v129 = vld [vmem:[%s3 + $0x20] sm:$0xff]
  %v130 = vld [vmem:[%s3 + $0x28] sm:$0xff]
  %v131 = vld [vmem:[%s3 + $0x30] sm:$0xff]
  %v132 = vld [vmem:[%s3 + $0x38] sm:$0xff]
  %v133 = vld [vmem:[%s3 + $0x40] sm:$0xff]
  %v134 = vld [vmem:[%s3 + $0x48] sm:$0xff]
  %v135 = vld [vmem:[%s3 + $0x50] sm:$0xff]
  %v136 = vld [vmem:[%s3 + $0x58] sm:$0xff]
  %v137 = vld [vmem:[%s3 + $0x60] sm:$0xff]
  %v138 = vld [vmem:[%s3 + $0x68] sm:$0xff]
  %v139 = vld [vmem:[%s3 + $0x70] sm:$0xff]
  %v140 = vld [vmem:[%s3 + $0x78] sm:$0xff]
  %v141 = vld [vmem:[%s3 + $0x80] sm:$0xff]
  %v142 = vld [vmem:[%s3 + $0x88] sm:$0xff]
  %v143 = vld [vmem:[%s3 + $0x90] sm:$0xff]
  %v144 = vld [vmem:[%s3 + $0x98] sm:$0xff]
  %v145 = vld [vmem:[%s3 + $0xa0] sm:$0xff]
  %v146 = vld [vmem:[%s3 + $0xa8] sm:$0xff]
  %v147 = vld [vmem:[%s3 + $0xb0] sm:$0xff]
  %v148 = vld [vmem:[%s3 + $0xb8] sm:$0xff]
  %v149 = vld [vmem:[%s3 + $0xc0] sm:$0xff]
  %v150 = vld [vmem:[%s3 + $0xc8] sm:$0xff]
  %v151 = vld [vmem:[%s3 + $0xd0] sm:$0xff]
  %v152 = vld [vmem:[%s3 + $0xd8] sm:$0xff]
  %v153 = vld [vmem:[%s3 + $0xe0] sm:$0xff]
  %v154 = vld [vmem:[%s3 + $0xe8] sm:$0xff]
  %v155 = vld [vmem:[%s3 + $0xf0] sm:$0xff]
  %v156 = vld [vmem:[%s3 + $0xf8] sm:$0xff]
  %v157 = vld [vmem:[%s4] sm:$0x3]
  %v159 = vlaneseq
  %v160 = vshrl.u32 %v159, 7
  %v161 = vsub.s32 0, %v160
  %v162 = vrot.slane %v157, %v161
  %v163 = vlaneseq
  %v164 = vshrl.u32 %v163, 7
  %v165 = vsub.s32 1, %v164
  %v166 = vrot.slane %v157, %v165
  %v201 = vunpack.c.l.b16 %v125
  %v202 = vunpack.c.h.b16 %v125
  %v203 = vunpack.c.l.b16 %v126
  %v204 = vunpack.c.h.b16 %v126
  %v205 = vunpack.c.l.b16 %v127
  %v206 = vunpack.c.h.b16 %v127
  %v207 = vunpack.c.l.b16 %v128
  %v208 = vunpack.c.h.b16 %v128
  %v209 = vunpack.c.l.b16 %v129
  %v210 = vunpack.c.h.b16 %v129
  %v211 = vunpack.c.l.b16 %v130
  %v212 = vunpack.c.h.b16 %v130
  %v213 = vunpack.c.l.b16 %v131
  %v214 = vunpack.c.h.b16 %v131
  %v215 = vunpack.c.l.b16 %v132
  %v216 = vunpack.c.h.b16 %v132
  %v217 = vunpack.c.l.b16 %v133
  %v218 = vunpack.c.h.b16 %v133
  %v219 = vunpack.c.l.b16 %v134
  %v220 = vunpack.c.h.b16 %v134
  %v221 = vunpack.c.l.b16 %v135
  %v222 = vunpack.c.h.b16 %v135
  %v223 = vunpack.c.l.b16 %v136
  %v224 = vunpack.c.h.b16 %v136
  %v225 = vunpack.c.l.b16 %v137
  %v226 = vunpack.c.h.b16 %v137
  %v227 = vunpack.c.l.b16 %v138
  %v228 = vunpack.c.h.b16 %v138
  %v229 = vunpack.c.l.b16 %v139
  %v230 = vunpack.c.h.b16 %v139
  %v231 = vunpack.c.l.b16 %v140
  %v232 = vunpack.c.h.b16 %v140
  %v233 = vunpack.c.l.b16 %v141
  %v234 = vunpack.c.h.b16 %v141
  %v235 = vunpack.c.l.b16 %v142
  %v236 = vunpack.c.h.b16 %v142
  %v237 = vunpack.c.l.b16 %v143
  %v238 = vunpack.c.h.b16 %v143
  %v239 = vunpack.c.l.b16 %v144
  %v240 = vunpack.c.h.b16 %v144
  %v241 = vunpack.c.l.b16 %v145
  %v242 = vunpack.c.h.b16 %v145
  %v243 = vunpack.c.l.b16 %v146
  %v244 = vunpack.c.h.b16 %v146
  %v245 = vunpack.c.l.b16 %v147
  %v246 = vunpack.c.h.b16 %v147
  %v247 = vunpack.c.l.b16 %v148
  %v248 = vunpack.c.h.b16 %v148
  %v249 = vunpack.c.l.b16 %v149
  %v250 = vunpack.c.h.b16 %v149
  %v251 = vunpack.c.l.b16 %v150
  %v252 = vunpack.c.h.b16 %v150
  %v253 = vunpack.c.l.b16 %v151
  %v254 = vunpack.c.h.b16 %v151
  %v255 = vunpack.c.l.b16 %v152
  %v256 = vunpack.c.h.b16 %v152
  %v257 = vunpack.c.l.b16 %v153
  %v258 = vunpack.c.h.b16 %v153
  %v259 = vunpack.c.l.b16 %v154
  %v260 = vunpack.c.h.b16 %v154
  %v261 = vunpack.c.l.b16 %v155
  %v262 = vunpack.c.h.b16 %v155
  %v263 = vunpack.c.l.b16 %v156
  %v264 = vunpack.c.h.b16 %v156
  %v265 = vpack.c.b16 %v203, %v201
  %v266 = vpack.c.b16 %v204, %v202
  %v267 = vpack.c.b16 %v207, %v205
  %v268 = vpack.c.b16 %v208, %v206
  %v269 = vpack.c.b16 %v211, %v209
  %v270 = vpack.c.b16 %v212, %v210
  %v271 = vpack.c.b16 %v215, %v213
  %v272 = vpack.c.b16 %v216, %v214
  %v273 = vpack.c.b16 %v219, %v217
  %v274 = vpack.c.b16 %v220, %v218
  %v275 = vpack.c.b16 %v223, %v221
  %v276 = vpack.c.b16 %v224, %v222
  %v277 = vpack.c.b16 %v227, %v225
  %v278 = vpack.c.b16 %v228, %v226
  %v279 = vpack.c.b16 %v231, %v229
  %v280 = vpack.c.b16 %v232, %v230
  %v281 = vpack.c.b16 %v235, %v233
  %v282 = vpack.c.b16 %v236, %v234
  %v283 = vpack.c.b16 %v239, %v237
  %v284 = vpack.c.b16 %v240, %v238
  %v285 = vpack.c.b16 %v243, %v241
  %v286 = vpack.c.b16 %v244, %v242
  %v287 = vpack.c.b16 %v247, %v245
  %v288 = vpack.c.b16 %v248, %v246
  %v289 = vpack.c.b16 %v251, %v249
  %v290 = vpack.c.b16 %v252, %v250
  %v291 = vpack.c.b16 %v255, %v253
  %v292 = vpack.c.b16 %v256, %v254
  %v293 = vpack.c.b16 %v259, %v257
  %v294 = vpack.c.b16 %v260, %v258
  %v295 = vpack.c.b16 %v263, %v261
  %v296 = vpack.c.b16 %v264, %v262
  %329 = vmatprep.subr.bf16.mxu0 %v266
  %330 = vmatpush1.bf16.msra.mxu0 %v265
  %331 = vmatprep.subr.bf16.mxu0 %v268
  %332 = vmatpush1.bf16.msra.mxu0 %v267
  %333 = vmatprep.subr.bf16.mxu0 %v270
  %334 = vmatpush1.bf16.msra.mxu0 %v269
  %335 = vmatprep.subr.bf16.mxu0 %v272
  %336 = vmatpush1.bf16.msra.mxu0 %v271
  %337 = vmatprep.subr.bf16.mxu0 %v274
  %338 = vmatpush1.bf16.msra.mxu0 %v273
  %339 = vmatprep.subr.bf16.mxu0 %v276
  %340 = vmatpush1.bf16.msra.mxu0 %v275
  %341 = vmatprep.subr.bf16.mxu0 %v278
  %342 = vmatpush1.bf16.msra.mxu0 %v277
  %343 = vmatprep.subr.bf16.mxu0 %v280
  %344 = vmatpush1.bf16.msra.mxu0 %v279
  %345 = vmatprep.subr.bf16.mxu0 %v282
  %346 = vmatpush1.bf16.msra.mxu0 %v281
  %347 = vmatprep.subr.bf16.mxu0 %v284
  %348 = vmatpush1.bf16.msra.mxu0 %v283
  %349 = vmatprep.subr.bf16.mxu0 %v286
  %350 = vmatpush1.bf16.msra.mxu0 %v285
  %351 = vmatprep.subr.bf16.mxu0 %v288
  %352 = vmatpush1.bf16.msra.mxu0 %v287
  %353 = vmatprep.subr.bf16.mxu0 %v290
  %354 = vmatpush1.bf16.msra.mxu0 %v289
  %355 = vmatprep.subr.bf16.mxu0 %v292
  %356 = vmatpush1.bf16.msra.mxu0 %v291
  %357 = vmatprep.subr.bf16.mxu0 %v294
  %358 = vmatpush1.bf16.msra.mxu0 %v293
  %359 = vmatprep.subr.bf16.mxu0 %v296
  %360 = vmatpush1.bf16.msra.mxu0 %v295
  %361 = vmatprep.mubr.bf16.mxu0 %v124
  %362 = vmatmul.mubr.bf16.gmra.mrb[0].mxu0 %v123
  %v363 = vpop.f32.mrb[0].mxu0
  %v364 = vadd.f32 %v162, %v363
  %v365 = vpop.f32.mrb[0].mxu0
  %v366 = vadd.f32 %v166, %v365
  %v367 = vpop.f32.mrb[0].mxu0
  %v368 = vadd.f32 %v162, %v367
  %v369 = vpop.f32.mrb[0].mxu0
  %v370 = vadd.f32 %v166, %v369
  %371 = vdwg.mxu0
  %v372 = vmax.f32 %v364, 0.0
  %v373 = vmax.f32 %v366, 0.0
  %v374 = vmax.f32 %v368, 0.0
  %v375 = vmax.f32 %v370, 0.0
  %v376 = vld [vmem:[%s5] sm:$0x3]
  %v378 = vlaneseq
  %v379 = vshrl.u32 %v378, 7
  %v380 = vsub.s32 0, %v379
  %v381 = vrot.slane %v376, %v380
  %v382 = vlaneseq
  %v383 = vshrl.u32 %v382, 7
  %v384 = vsub.s32 1, %v383
  %v385 = vrot.slane %v376, %v384
  %v388 = vmul.f32 %v372, %v381
  %v389 = vmul.f32 %v373, %v385
  %v390 = vmul.f32 %v374, %v381
  %v391 = vmul.f32 %v375, %v385
  %v392 = vadd.f32 %v388, %v389
  %393 = vadd.xlane.f32.xlu0 %v392
  %v394 = vpop.xlane.xlu0 %393
  %v395 = vadd.f32 %v390, %v391
  %396 = vadd.xlane.f32.xlu0 %v395
  %v397 = vpop.xlane.xlu0 %396
  %v398 = vld [vmem:[#allocation2] sm:$0x1]
  %v400 = vlaneseq
  %v401 = vshrl.u32 %v400, 7
  %v402 = vsub.s32 0, %v401
  %v403 = vrot.slane %v398, %v402
  %v405 = vadd.f32 %v394, %v403
  %v406 = vadd.f32 %v397, %v403
  %vm407 = vcmask 7168
  %408 = vst.msk [vmem:[%s7] sm:$0xff] %vm407, %v405
  %409 = vst.msk [vmem:[%s7 + $0x8] sm:$0xff] %vm407, %v406
  // Predicated region
  $region30: #{critic_forward.1} parent=0 // pred_check
    _
  $region31: #{critic_forward.1} parent=0 // pred_check_branch
    %411 = sbr.rel (0) target = $region33
  $region32: #{critic_forward.1} parent=0 // pred_region
    _
  $region33: #{critic_forward.1} parent=0 // pred_fallthru
    _
  // Predicated region
  $region34: #{critic_forward.1} parent=0 // pred_check
    _
  $region35: #{critic_forward.1} parent=0 // pred_check_branch
    %413 = sbr.rel (0) target = $region37
  $region36: #{critic_forward.1} parent=0 // pred_region
    _
  $region37: #{critic_forward.1} parent=0 // pred_fallthru
    _

</llo_original>
